<compile_context>
chip_gen: v7x
topology: tpu7x:2x2x1
jax: 0.10.0
libtpu: 0.0.40
codegen_flags: <defaults>
</compile_context>

<pallas_src>
import math

import jax
import jax.numpy as jnp
from jax.experimental import pallas as pl
from jax.experimental.pallas import tpu as pltpu

_INT32_MAX = 2**31 - 1
_VMEM_LIMIT = 32 * 1024 * 1024  # safe scoped-VMEM request on v5e/v6e/v7x


def _dtype_min(dtype):
    dtype = jnp.dtype(dtype)
    if dtype == jnp.bool_:
        return False
    if jnp.issubdtype(dtype, jnp.floating):
        return -float("inf")
    return int(jnp.iinfo(dtype).min)


def _sublane(dtype):
    # sublane packing granularity: 8 rows (32-bit), 16 (16-bit), 32 (8-bit)
    return 8 * max(1, 4 // jnp.dtype(dtype).itemsize)


# ---------------------------------------------------------------------------
# Kernel 1: reduce along the LAST (lane) axis of a 2D (rows, N) view.
# Grid = (row_tiles, n_tiles); running max/argmax kept in VMEM scratch.
# ---------------------------------------------------------------------------
def _make_lastdim_kernel(with_indices, tn, min_val, floating):
    def kernel(x_ref, *refs):
        if with_indices:
            vo_ref, io_ref, vacc, iacc = refs
        else:
            vo_ref, vacc = refs
        k = pl.program_id(1)

        @pl.when(k == 0)
        def _init():
            vacc[...] = jnp.full(vacc.shape, min_val, vacc.dtype)
            if with_indices:
                iacc[...] = jnp.zeros(iacc.shape, jnp.int32)

        x = x_ref[...]                                      # (tr, tn)
        loc_v = jnp.max(x, axis=-1, keepdims=True)          # (tr, 1)
        prev_v = vacc[...]
        better = loc_v > prev_v
        if floating:  # NaN beats everything; first NaN wins (torch semantics)
            better = jnp.logical_or(
                better,
                jnp.logical_and(jnp.isnan(loc_v), jnp.logical_not(jnp.isnan(prev_v))))
        if with_indices:
            prev_i = iacc[...]
            iota = jax.lax.broadcasted_iota(jnp.int32, x.shape, 1) + k * tn
            match = x == loc_v
            if floating:
                match = jnp.logical_or(match, jnp.isnan(x))
            loc_i = jnp.min(jnp.where(match, iota, _INT32_MAX),
                            axis=-1, keepdims=True)
            iacc[...] = jnp.where(better, loc_i, prev_i)
        vacc[...] = jnp.where(better, loc_v, prev_v)

        @pl.when(k == pl.num_programs(1) - 1)
        def _finalize():
            vo_ref[...] = vacc[...]
            if with_indices:
                io_ref[...] = iacc[...]

    return kernel


def _reduce_last_axis(x2d, with_indices, target_bytes=None):
    """x2d: (R, N) -> max (and first argmax) along the last axis."""
    R, N = x2d.shape
    dtype = x2d.dtype
    itemsize = jnp.dtype(dtype).itemsize
    sub = _sublane(dtype)
    floating = jnp.issubdtype(dtype, jnp.floating)
    min_val = _dtype_min(dtype)
    if target_bytes is None:
        # argmax needs iota/compare temporaries -> keep the x tile smaller
        target_bytes = (1 if with_indices else 2) * 1024 * 1024

    # ---- reduction (lane) tile -------------------------------------------
    row_budget = max(128, target_bytes // (sub * itemsize))
    if N <= row_budget:
        tn = N                                   # full lane dim (always legal)
    else:
        cap = 1024 if with_indices else 2048     # moderate lane width (vreg pressure)
        tn = max(128, min(cap, (row_budget // 128) * 128))
        if N % tn != 0:
            x2d = jnp.pad(x2d, ((0, 0), (0, (-N) % tn)), constant_values=min_val)
    Np = x2d.shape[1]

    # ---- row tile (byte-budgeted, sublane-aligned) -------------------------
    max_tr = max(sub, min(8192, (target_bytes // max(tn * itemsize, 1)) // sub * sub))
    if R <= max_tr:
        tr = R                                   # single row tile (full dim is legal)
    else:
        tr = max_tr
        if R % tr != 0:
            x2d = jnp.pad(x2d, ((0, (-R) % tr), (0, 0)), constant_values=min_val)
    Rp = x2d.shape[0]

    grid = (Rp // tr, Np // tn)                  # reduction tiles last
    kernel = _make_lastdim_kernel(with_indices, tn, min_val, floating)

    val_shape = jax.ShapeDtypeStruct((Rp, 1), dtype)
    val_spec = pl.BlockSpec((tr, 1), lambda i, k: (i, 0))
    scratch = [pltpu.VMEM((tr, 1), dtype)]
    if with_indices:
        out_shape = (val_shape, jax.ShapeDtypeStruct((Rp, 1), jnp.int32))
        out_specs = (val_spec, pl.BlockSpec((tr, 1), lambda i, k: (i, 0)))
        scratch.append(pltpu.VMEM((tr, 1), jnp.int32))
    else:
        out_shape = val_shape
        out_specs = val_spec

    res = pl.pallas_call(
        kernel,
        out_shape=out_shape,
        grid_spec=pltpu.PrefetchScalarGridSpec(
            num_scalar_prefetch=0,
            grid=grid,
            in_specs=[pl.BlockSpec((tr, tn), lambda i, k: (i, k))],
            out_specs=out_specs,
            scratch_shapes=scratch),
        compiler_params=pltpu.CompilerParams(
            dimension_semantics=("parallel", "arbitrary"),
            vmem_limit_bytes=_VMEM_LIMIT),
    )(x2d)

    if with_indices:
        vals, idxs = res
        return vals[:R, 0], idxs[:R, 0]
    return res[:R, 0]


# ---------------------------------------------------------------------------
# Kernel 2: reduce a MIDDLE axis of a (P, RED, Q) view along the SUBLANE axis.
# No HBM transpose; lane-dense (1, t_q) outputs.
# ---------------------------------------------------------------------------
def _make_middle_kernel(with_indices, t_red, min_val, floating):
    def kernel(x_ref, *refs):
        if with_indices:
            vo_ref, io_ref, vacc, iacc = refs
        else:
            vo_ref, vacc = refs
        r = pl.program_id(2)

        @pl.when(r == 0)
        def _init():
            vacc[...] = jnp.full(vacc.shape, min_val, vacc.dtype)
            if with_indices:
                iacc[...] = jnp.zeros(iacc.shape, jnp.int32)

        x = x_ref[0]                                        # (t_red, t_q)
        loc_v = jnp.max(x, axis=0, keepdims=True)           # (1, t_q)
        prev_v = vacc[...]
        better = loc_v > prev_v
        if floating:
            better = jnp.logical_or(
                better,
                jnp.logical_and(jnp.isnan(loc_v), jnp.logical_not(jnp.isnan(prev_v))))
        if with_indices:
            prev_i = iacc[...]
            iota = jax.lax.broadcasted_iota(jnp.int32, x.shape, 0) + r * t_red
            match = x == loc_v
            if floating:
                match = jnp.logical_or(match, jnp.isnan(x))
            loc_i = jnp.min(jnp.where(match, iota, _INT32_MAX),
                            axis=0, keepdims=True)
            iacc[...] = jnp.where(better, loc_i, prev_i)
        vacc[...] = jnp.where(better, loc_v, prev_v)

        @pl.when(r == pl.num_programs(2) - 1)
        def _finalize():
            vo_ref[0] = vacc[...]
            if with_indices:
                io_ref[0] = iacc[...]

    return kernel


def _reduce_middle_axis(x3d, with_indices, target_bytes=None):
    """x3d: (P, RED, Q) -> max (and first argmax) along axis 1."""
    P, RED, Q = x3d.shape
    dtype = x3d.dtype
    itemsize = jnp.dtype(dtype).itemsize
    sub = _sublane(dtype)
    floating = jnp.issubdtype(dtype, jnp.floating)
    min_val = _dtype_min(dtype)
    if target_bytes is None:
        target_bytes = (1 if with_indices else 2) * 1024 * 1024

    # ---- lane (Q) tile ------------------------------------------------------
    lane_budget = max(128, target_bytes // (sub * itemsize))
    if Q <= lane_budget:
        t_q = Q
    else:
        cap = 1024 if with_indices else 2048
        t_q = max(128, min(cap, (lane_budget // 128) * 128))
        if Q % t_q != 0:
            x3d = jnp.pad(x3d, ((0, 0), (0, 0), (0, (-Q) % t_q)),
                          constant_values=min_val)
    Qp = x3d.shape[2]

    # ---- reduction (sublane) tile -------------------------------------------
    max_tred = max(sub, (target_bytes // max(t_q * itemsize, 1)) // sub * sub)
    if RED <= max_tred:
        t_red = RED
    else:
        t_red = max_tred
        if RED % t_red != 0:
            x3d = jnp.pad(x3d, ((0, 0), (0, (-RED) % t_red), (0, 0)),
                          constant_values=min_val)
    REDp = x3d.shape[1]

    grid = (P, Qp // t_q, REDp // t_red)         # reduction tiles last
    kernel = _make_middle_kernel(with_indices, t_red, min_val, floating)

    val_shape = jax.ShapeDtypeStruct((P, 1, Qp), dtype)
    val_spec = pl.BlockSpec((1, 1, t_q), lambda p, q, r: (p, 0, q))
    scratch = [pltpu.VMEM((1, t_q), dtype)]
    if with_indices:
        out_shape = (val_shape, jax.ShapeDtypeStruct((P, 1, Qp), jnp.int32))
        out_specs = (val_spec, pl.BlockSpec((1, 1, t_q), lambda p, q, r: (p, 0, q)))
        scratch.append(pltpu.VMEM((1, t_q), jnp.int32))
    else:
        out_shape = val_shape
        out_specs = val_spec

    res = pl.pallas_call(
        kernel,
        out_shape=out_shape,
        grid_spec=pltpu.PrefetchScalarGridSpec(
            num_scalar_prefetch=0,
            grid=grid,
            in_specs=[pl.BlockSpec((1, t_red, t_q), lambda p, q, r: (p, r, q))],
            out_specs=out_specs,
            scratch_shapes=scratch),
        compiler_params=pltpu.CompilerParams(
            dimension_semantics=("parallel", "parallel", "arbitrary"),
            vmem_limit_bytes=_VMEM_LIMIT),
    )(x3d)

    if with_indices:
        vals, idxs = res
        return vals[:, 0, :Q], idxs[:, 0, :Q]
    return res[:, 0, :Q]


def _global_chunk(total):
    # lane-chunk: multiple of 128, aims for >= 8 rows, capped for VMEM.
    return max(128, min(8192, (total // 8) // 128 * 128))


# ---------------------------------------------------------------------------
# Module wrapper
# ---------------------------------------------------------------------------
class Max:
    """JAX/Pallas version of torchwrench.nn.modules.tensor.Max (torch.max)."""

    def __init__(self, dim=None, keepdim=False, *, return_values=True,
                 return_indices=None):
        if return_indices is None:
            return_indices = dim is not None
        if not return_values and not return_indices:
            raise ValueError("at least one of return_values/return_indices must be True")
        if dim is None and keepdim:
            raise ValueError("keepdim=True requires dim is not None")
        self.dim = dim
        self.keepdim = keepdim
        self.return_values = return_values
        self.return_indices = return_indices

    def __call__(self, x):
        if self.dim is None:
            value, index = self._global_max(x)
        else:
            value, index = self._dim_max(x)
        if self.return_values and self.return_indices:
            return value, index
        if self.return_values:
            return value
        return index

    # -- dim=None: global max (value and/or flat argmax) ---------------------
    def _global_max(self, x):
        total = x.size
        flat = x.reshape(-1)
        chunk = _global_chunk(total)
        rows = -(-total // chunk)
        if rows * chunk != total:
            flat = jnp.pad(flat, (0, rows * chunk - total),
                           constant_values=_dtype_min(x.dtype))
        x2d = flat.reshape(rows, chunk)
        if self.return_indices:
            row_v, row_i = _reduce_last_axis(x2d, True)
            win = jnp.argmax(row_v)              # first occurrence / first NaN
            value = row_v[win]
            index = win.astype(jnp.int32) * chunk + row_i[win]
            return value, index
        # values-only kernel: no argmax compute, no index DMA
        row_v = _reduce_last_axis(x2d, False)
        return jnp.max(row_v), None

    # -- dim given: row-wise max/argmax ---------------------------------------
    def _dim_max(self, x):
        dim = self.dim % x.ndim
        need_idx = self.return_indices
        if dim == x.ndim - 1:
            n = x.shape[-1]
            rows = max(1, math.prod(x.shape[:-1]))
            res = _reduce_last_axis(x.reshape(rows, n), need_idx)
        else:
            p = max(1, math.prod(x.shape[:dim]))
            red = x.shape[dim]
            q = max(1, math.prod(x.shape[dim + 1:]))
            res = _reduce_middle_axis(x.reshape(p, red, q), need_idx)
        out_shape = x.shape[:dim] + x.shape[dim + 1:]
        if need_idx:
            value = res[0].reshape(out_shape)
            index = res[1].reshape(out_shape)
        else:
            value = res.reshape(out_shape)
            index = None
        if self.keepdim:
            value = jnp.expand_dims(value, dim)
            if index is not None:
                index = jnp.expand_dims(index, dim)
        return value, index


if __name__ == "__main__":
    key = jax.random.PRNGKey(0)
    x = jax.random.normal(key, (2, 4, 16, 16), dtype=jnp.float32)

    # 1) dim=-1 -> (values, indices)   [lane-reduction kernel, argmax variant]
    vals, idxs = Max(dim=-1)(x)
    jax.block_until_ready((vals, idxs))
    assert vals.shape == (2, 4, 16) and idxs.shape == (2, 4, 16)
    assert jnp.allclose(vals, jnp.max(x, axis=-1))
    assert jnp.array_equal(idxs, jnp.argmax(x, axis=-1).astype(jnp.int32))

    # 2) dim=1, keepdim=True   [sublane-reduction kernel, no HBM transpose]
    vals_c, idxs_c = Max(dim=1, keepdim=True)(x)
    jax.block_until_ready((vals_c, idxs_c))
    assert vals_c.shape == (2, 1, 16, 16) and idxs_c.shape == (2, 1, 16, 16)
    assert jnp.allclose(vals_c, jnp.max(x, axis=1, keepdims=True))
    assert jnp.array_equal(idxs_c, jnp.argmax(x, axis=1).astype(jnp.int32)[:, None])

    # 3) dim=None -> global max value only   [values-only kernel variant]
    gmax = Max(dim=None)(x)
    jax.block_until_ready(gmax)
    assert gmax.shape == () and jnp.allclose(gmax, jnp.max(x))

    # 4) dim=None with indices -> global flat argmax
    gv, gi = Max(dim=None, return_indices=True)(x)
    jax.block_until_ready((gv, gi))
    assert jnp.allclose(gv, jnp.max(x))
    assert int(gi) == int(jnp.argmax(x.reshape(-1)))

    # 5) values-only along the last dim (argmax path skipped entirely)
    v_only = Max(dim=-1, return_indices=False)(x)
    jax.block_until_ready(v_only)
    assert jnp.allclose(v_only, jnp.max(x, axis=-1))

    # 6) force reduction-axis tiling on the lane kernel (accumulator/combine path)
    y = jax.random.normal(jax.random.PRNGKey(1), (16, 512), dtype=jnp.float32)
    v_t, i_t = _reduce_last_axis(y, True, target_bytes=4096)   # tn=128 -> 4 k-tiles
    jax.block_until_ready((v_t, i_t))
    assert jnp.allclose(v_t, jnp.max(y, axis=-1))
    assert jnp.array_equal(i_t, jnp.argmax(y, axis=-1).astype(jnp.int32))

    # 7) force tiling + padding on the sublane kernel (RED=100 -> padded to 104)
    z = jax.random.normal(jax.random.PRNGKey(2), (2, 100, 256), dtype=jnp.float32)
    v_z, i_z = _reduce_middle_axis(z, True, target_bytes=8192)  # t_red=8 -> 13 r-tiles
    jax.block_until_ready((v_z, i_z))
    assert jnp.allclose(v_z, jnp.max(z, axis=1))
    assert jnp.array_equal(i_z, jnp.argmax(z, axis=1).astype(jnp.int32))

    # 8) NaN handling matches torch: value is NaN, index of the first NaN
    xn = jnp.array([[1.0, jnp.nan, 3.0, 2.0]], dtype=jnp.float32)
    vn, inx = Max(dim=-1)(xn)
    jax.block_until_ready((vn, inx))
    assert jnp.isnan(vn[0]) and int(inx[0]) == 1

    print("KERNEL_OK")
</pallas_src>

<mosaic_0001>
module attributes {stable_mosaic.version = 11 : i64} {
  func.func @kernel(%arg0: i32, %arg1: i32, %arg2: memref<128x16xf32, #tpu.memory_space<vmem>>, %arg3: memref<128x1xf32, #tpu.memory_space<vmem>>, %arg4: memref<128x1xi32, #tpu.memory_space<vmem>>, %arg5: memref<128x1xf32, #tpu.memory_space<vmem>>, %arg6: memref<128x1xi32, #tpu.memory_space<vmem>>) attributes {dimension_semantics = [#tpu.dimension_semantics<parallel>, #tpu.dimension_semantics<arbitrary>], iteration_bounds = array<i64: 1, 1>, scalar_prefetch = 0 : i64, scratch_operands = 2 : i64, tpu.core_type = #tpu.core_type<tc>, window_params = [{transform_indices = @transform_0, window_bounds = array<i64: 128, 16>}, {transform_indices = @transform_1, window_bounds = array<i64: 128, 1>}, {transform_indices = @transform_2, window_bounds = array<i64: 128, 1>}]} {
    %c0_i32 = arith.constant 0 : i32
    %0 = arith.cmpi eq, %arg1, %c0_i32 : i32
    %1 = arith.extui %0 : i1 to i32
    %c0_i32_0 = arith.constant 0 : i32
    %2 = arith.cmpi ne, %1, %c0_i32_0 : i32
    scf.if %2 {
      %cst_14 = arith.constant 0xFF800000 : f32
      %33 = vector.broadcast %cst_14 : f32 to vector<128x1xf32>
      %c0_15 = arith.constant 0 : index
      %c0_16 = arith.constant 0 : index
      %34 = vector.load %arg5[%c0_15, %c0_16] : memref<128x1xf32, #tpu.memory_space<vmem>>, vector<128x1xf32>
      tpu.vector_store %arg5[%c0_15, %c0_16], %33 {strides = array<i32>} : memref<128x1xf32, #tpu.memory_space<vmem>>, vector<128x1xf32>,
      %c0_i32_17 = arith.constant 0 : i32
      %35 = vector.broadcast %c0_i32_17 : i32 to vector<128x1xi32>
      %c0_18 = arith.constant 0 : index
      %c0_19 = arith.constant 0 : index
      %36 = vector.load %arg6[%c0_18, %c0_19] : memref<128x1xi32, #tpu.memory_space<vmem>>, vector<128x1xi32>
      tpu.vector_store %arg6[%c0_18, %c0_19], %35 {strides = array<i32>} : memref<128x1xi32, #tpu.memory_space<vmem>>, vector<128x1xi32>,
    } else {
    }
    %c0 = arith.constant 0 : index
    %c0_1 = arith.constant 0 : index
    %3 = vector.load %arg2[%c0, %c0_1] : memref<128x16xf32, #tpu.memory_space<vmem>>, vector<128x16xf32>
    %cst = arith.constant dense<0xFF800000> : vector<128xf32>
    %4 = vector.multi_reduction <maximumf>, %3, %cst [1] : vector<128x16xf32> to vector<128xf32>
    %5 = vector.shape_cast %4 : vector<128xf32> to vector<128x1xf32>
    %c0_2 = arith.constant 0 : index
    %c0_3 = arith.constant 0 : index
    %6 = vector.load %arg5[%c0_2, %c0_3] : memref<128x1xf32, #tpu.memory_space<vmem>>, vector<128x1xf32>
    %7 = arith.cmpf ogt, %5, %6 : vector<128x1xf32>
    %8 = arith.cmpf one, %5, %5 : vector<128x1xf32>
    %9 = arith.cmpf one, %6, %6 : vector<128x1xf32>
    %cst_4 = arith.constant dense<true> : vector<128x1xi1>
    %10 = arith.xori %9, %cst_4 : vector<128x1xi1>
    %11 = arith.andi %8, %10 : vector<128x1xi1>
    %12 = arith.ori %7, %11 : vector<128x1xi1>
    %c0_5 = arith.constant 0 : index
    %c0_6 = arith.constant 0 : index
    %13 = vector.load %arg6[%c0_5, %c0_6] : memref<128x1xi32, #tpu.memory_space<vmem>>, vector<128x1xi32>
    %14 = tpu.iota {dimensions = array<i32: 1>} : vector<128x16xi32>
    %c16_i32 = arith.constant 16 : i32
    %15 = arith.muli %arg1, %c16_i32 : i32
    %16 = vector.broadcast %15 : i32 to vector<128x16xi32>
    %17 = arith.addi %14, %16 : vector<128x16xi32>
    %18 = vector.broadcast %5 : vector<128x1xf32> to vector<128x16xf32>
    %19 = arith.cmpf oeq, %3, %18 : vector<128x16xf32>
    %20 = arith.cmpf one, %3, %3 : vector<128x16xf32>
    %21 = arith.ori %19, %20 : vector<128x16xi1>
    %c2147483647_i32 = arith.constant 2147483647 : i32
    %22 = vector.broadcast %c2147483647_i32 : i32 to vector<128x16xi32>
    %23 = arith.select %21, %17, %22 : vector<128x16xi1>, vector<128x16xi32>
    %cst_7 = arith.constant dense<2147483647> : vector<128xi32>
    %24 = vector.multi_reduction <minsi>, %23, %cst_7 [1] : vector<128x16xi32> to vector<128xi32>
    %25 = vector.shape_cast %24 : vector<128xi32> to vector<128x1xi32>
    %26 = arith.select %12, %25, %13 : vector<128x1xi1>, vector<128x1xi32>
    %c0_8 = arith.constant 0 : index
    %c0_9 = arith.constant 0 : index
    %27 = vector.load %arg6[%c0_8, %c0_9] : memref<128x1xi32, #tpu.memory_space<vmem>>, vector<128x1xi32>
    tpu.vector_store %arg6[%c0_8, %c0_9], %26 {strides = array<i32>} : memref<128x1xi32, #tpu.memory_space<vmem>>, vector<128x1xi32>,
    %28 = arith.select %12, %5, %6 : vector<128x1xi1>, vector<128x1xf32>
    %c0_10 = arith.constant 0 : index
    %c0_11 = arith.constant 0 : index
    %29 = vector.load %arg5[%c0_10, %c0_11] : memref<128x1xf32, #tpu.memory_space<vmem>>, vector<128x1xf32>
    tpu.vector_store %arg5[%c0_10, %c0_11], %28 {strides = array<i32>} : memref<128x1xf32, #tpu.memory_space<vmem>>, vector<128x1xf32>,
    %c0_i32_12 = arith.constant 0 : i32
    %30 = arith.cmpi eq, %arg1, %c0_i32_12 : i32
    %31 = arith.extui %30 : i1 to i32
    %c0_i32_13 = arith.constant 0 : i32
    %32 = arith.cmpi ne, %31, %c0_i32_13 : i32
    scf.if %32 {
      %c0_14 = arith.constant 0 : index
      %c0_15 = arith.constant 0 : index
      %33 = vector.load %arg5[%c0_14, %c0_15] : memref<128x1xf32, #tpu.memory_space<vmem>>, vector<128x1xf32>
      %c0_16 = arith.constant 0 : index
      %c0_17 = arith.constant 0 : index
      %34 = vector.load %arg3[%c0_16, %c0_17] : memref<128x1xf32, #tpu.memory_space<vmem>>, vector<128x1xf32>
      tpu.vector_store %arg3[%c0_16, %c0_17], %33 {strides = array<i32>} : memref<128x1xf32, #tpu.memory_space<vmem>>, vector<128x1xf32>,
      %c0_18 = arith.constant 0 : index
      %c0_19 = arith.constant 0 : index
      %35 = vector.load %arg6[%c0_18, %c0_19] : memref<128x1xi32, #tpu.memory_space<vmem>>, vector<128x1xi32>
      %c0_20 = arith.constant 0 : index
      %c0_21 = arith.constant 0 : index
      %36 = vector.load %arg4[%c0_20, %c0_21] : memref<128x1xi32, #tpu.memory_space<vmem>>, vector<128x1xi32>
      tpu.vector_store %arg4[%c0_20, %c0_21], %35 {strides = array<i32>} : memref<128x1xi32, #tpu.memory_space<vmem>>, vector<128x1xi32>,
    } else {
    }
    return
  }
  func.func @transform_0(%arg0: i32, %arg1: i32) -> (i32, i32) {
    %c0_i32 = arith.constant 0 : i32
    return %arg0, %arg1 : i32, i32
  }
  func.func @transform_1(%arg0: i32, %arg1: i32) -> (i32, i32) {
    %c0_i32 = arith.constant 0 : i32
    %c0_i32_0 = arith.constant 0 : i32
    return %arg0, %c0_i32 : i32, i32
  }
  func.func @transform_2(%arg0: i32, %arg1: i32) -> (i32, i32) {
    %c0_i32 = arith.constant 0 : i32
    %c0_i32_0 = arith.constant 0 : i32
    return %arg0, %c0_i32 : i32, i32
  }
}

</mosaic_0001>

<llo_original>
// kernel: tpu_custom_call.1
$region0: #{tpu_custom_call.1}
  #allocation0 [shape = 'u32[]', space=smem, size = 0x4, offset = 0x4, fixed_abs, tag = 'smem constant byte address 0x4 - core index']
  #allocation1 [shape = 'u32[144,128]{1,0:T(1,128)}', space=vmem, size = 0x12000, scoped, tag = 'internal scratch']
  #allocation2 [shape = 'f32[128,1]{1,0:T(8,128)}', space=vmem, size = 0x10000, scoped, tag = 'scratch operand']
  #allocation3 [shape = 's32[128,1]{1,0:T(8,128)}', space=vmem, size = 0x10000, scoped, tag = 'scratch operand']
  %s0 = inlined_call_operand.vmem [shape: f32[128,16], index: 0, kind: input, shape index: {}]
  %s1 = inlined_call_operand.vmem [shape: f32[128,1], index: 1, kind: output, shape index: {0}]
  %s2 = inlined_call_operand.vmem [shape: s32[128,1], index: 2, kind: output, shape index: {1}]
  %3 = xla_tuple %s1, %s2
  %s4 = sld [smem:[#allocation0]]
  $region30: #{tpu_custom_call.1} parent=0
    _
  %s6 = ssub.s32 1, %s4
  %s7 = scalar_select 0, %s6, %s4
  // Predicated region
  $region2: #{tpu_custom_call.1} parent=0 // pred_check
    _
  $region3: #{tpu_custom_call.1} parent=0 // pred_check_branch
    %9 = sbr.rel (0) target = $region5
  $region4: #{tpu_custom_call.1} parent=0 // pred_region
    _
  $region5: #{tpu_custom_call.1} parent=0 // pred_fallthru
    _
  %p10 = scmp.eq.s32.totalorder 0, 0
  // Predicated region
  $region6: #{tpu_custom_call.1} parent=0 // pred_check
    %p11 = pneg %p10
  $region7: #{tpu_custom_call.1} parent=0 // pred_check_branch
    %13 = sbr.rel (%p11) target = $region9
  $region8: #{tpu_custom_call.1} parent=0 // pred_region
    %vm14 = vcmask 7168
    %15 = vst.msk [vmem:[#allocation2] sm:$0xff] %vm14, -inf
    %16 = vst.msk [vmem:[#allocation2 + $0x8] sm:$0xff] %vm14, -inf
    %17 = vst.msk [vmem:[#allocation2 + $0x10] sm:$0xff] %vm14, -inf
    %18 = vst.msk [vmem:[#allocation2 + $0x18] sm:$0xff] %vm14, -inf
    %19 = vst.msk [vmem:[#allocation2 + $0x20] sm:$0xff] %vm14, -inf
    %20 = vst.msk [vmem:[#allocation2 + $0x28] sm:$0xff] %vm14, -inf
    %21 = vst.msk [vmem:[#allocation2 + $0x30] sm:$0xff] %vm14, -inf
    %22 = vst.msk [vmem:[#allocation2 + $0x38] sm:$0xff] %vm14, -inf
    %23 = vst.msk [vmem:[#allocation2 + $0x40] sm:$0xff] %vm14, -inf
    %24 = vst.msk [vmem:[#allocation2 + $0x48] sm:$0xff] %vm14, -inf
    %25 = vst.msk [vmem:[#allocation2 + $0x50] sm:$0xff] %vm14, -inf
    %26 = vst.msk [vmem:[#allocation2 + $0x58] sm:$0xff] %vm14, -inf
    %27 = vst.msk [vmem:[#allocation2 + $0x60] sm:$0xff] %vm14, -inf
    %28 = vst.msk [vmem:[#allocation2 + $0x68] sm:$0xff] %vm14, -inf
    %29 = vst.msk [vmem:[#allocation2 + $0x70] sm:$0xff] %vm14, -inf
    %30 = vst.msk [vmem:[#allocation2 + $0x78] sm:$0xff] %vm14, -inf
    %31 = vst.msk [vmem:[#allocation3] sm:$0xff] %vm14, 0
    %32 = vst.msk [vmem:[#allocation3 + $0x8] sm:$0xff] %vm14, 0
    %33 = vst.msk [vmem:[#allocation3 + $0x10] sm:$0xff] %vm14, 0
    %34 = vst.msk [vmem:[#allocation3 + $0x18] sm:$0xff] %vm14, 0
    %35 = vst.msk [vmem:[#allocation3 + $0x20] sm:$0xff] %vm14, 0
    %36 = vst.msk [vmem:[#allocation3 + $0x28] sm:$0xff] %vm14, 0
    %37 = vst.msk [vmem:[#allocation3 + $0x30] sm:$0xff] %vm14, 0
    %38 = vst.msk [vmem:[#allocation3 + $0x38] sm:$0xff] %vm14, 0
    %39 = vst.msk [vmem:[#allocation3 + $0x40] sm:$0xff] %vm14, 0
    %40 = vst.msk [vmem:[#allocation3 + $0x48] sm:$0xff] %vm14, 0
    %41 = vst.msk [vmem:[#allocation3 + $0x50] sm:$0xff] %vm14, 0
    %42 = vst.msk [vmem:[#allocation3 + $0x58] sm:$0xff] %vm14, 0
    %43 = vst.msk [vmem:[#allocation3 + $0x60] sm:$0xff] %vm14, 0
    %44 = vst.msk [vmem:[#allocation3 + $0x68] sm:$0xff] %vm14, 0
    %45 = vst.msk [vmem:[#allocation3 + $0x70] sm:$0xff] %vm14, 0
    %46 = vst.msk [vmem:[#allocation3 + $0x78] sm:$0xff] %vm14, 0
  $region9: #{tpu_custom_call.1} parent=0 // pred_fallthru
    _
  %v47 = vld [vmem:[%s0] sm:$0xff]
  %v48 = vld [vmem:[%s0 + $0x8] sm:$0xff]
  %v49 = vld [vmem:[%s0 + $0x10] sm:$0xff]
  %v50 = vld [vmem:[%s0 + $0x18] sm:$0xff]
  %v51 = vld [vmem:[%s0 + $0x20] sm:$0xff]
  %v52 = vld [vmem:[%s0 + $0x28] sm:$0xff]
  %v53 = vld [vmem:[%s0 + $0x30] sm:$0xff]
  %v54 = vld [vmem:[%s0 + $0x38] sm:$0xff]
  %v55 = vld [vmem:[%s0 + $0x40] sm:$0xff]
  %v56 = vld [vmem:[%s0 + $0x48] sm:$0xff]
  %v57 = vld [vmem:[%s0 + $0x50] sm:$0xff]
  %v58 = vld [vmem:[%s0 + $0x58] sm:$0xff]
  %v59 = vld [vmem:[%s0 + $0x60] sm:$0xff]
  %v60 = vld [vmem:[%s0 + $0x68] sm:$0xff]
  %v61 = vld [vmem:[%s0 + $0x70] sm:$0xff]
  %v62 = vld [vmem:[%s0 + $0x78] sm:$0xff]
  %vm63 = vcmask 130048
  %v64 = vsel %vm63, %v47, -inf
  %65 = vmax.xlane.f32.xlu0 %v64
  %v66 = vpop.xlane.xlu0 %65
  %v67 = vsel %vm63, %v48, -inf
  %68 = vmax.xlane.f32.xlu0 %v67
  %v69 = vpop.xlane.xlu0 %68
  %v70 = vsel %vm63, %v49, -inf
  %71 = vmax.xlane.f32.xlu0 %v70
  %v72 = vpop.xlane.xlu0 %71
  %v73 = vsel %vm63, %v50, -inf
  %74 = vmax.xlane.f32.xlu0 %v73
  %v75 = vpop.xlane.xlu0 %74
  %v76 = vsel %vm63, %v51, -inf
  %77 = vmax.xlane.f32.xlu0 %v76
  %v78 = vpop.xlane.xlu0 %77
  %v79 = vsel %vm63, %v52, -inf
  %80 = vmax.xlane.f32.xlu0 %v79
  %v81 = vpop.xlane.xlu0 %80
  %v82 = vsel %vm63, %v53, -inf
  %83 = vmax.xlane.f32.xlu0 %v82
  %v84 = vpop.xlane.xlu0 %83
  %v85 = vsel %vm63, %v54, -inf
  %86 = vmax.xlane.f32.xlu0 %v85
  %v87 = vpop.xlane.xlu0 %86
  %v88 = vsel %vm63, %v55, -inf
  %89 = vmax.xlane.f32.xlu0 %v88
  %v90 = vpop.xlane.xlu0 %89
  %v91 = vsel %vm63, %v56, -inf
  %92 = vmax.xlane.f32.xlu0 %v91
  %v93 = vpop.xlane.xlu0 %92
  %v94 = vsel %vm63, %v57, -inf
  %95 = vmax.xlane.f32.xlu0 %v94
  %v96 = vpop.xlane.xlu0 %95
  %v97 = vsel %vm63, %v58, -inf
  %98 = vmax.xlane.f32.xlu0 %v97
  %v99 = vpop.xlane.xlu0 %98
  %v100 = vsel %vm63, %v59, -inf
  %101 = vmax.xlane.f32.xlu0 %v100
  %v102 = vpop.xlane.xlu0 %101
  %v103 = vsel %vm63, %v60, -inf
  %104 = vmax.xlane.f32.xlu0 %v103
  %v105 = vpop.xlane.xlu0 %104
  %v106 = vsel %vm63, %v61, -inf
  %107 = vmax.xlane.f32.xlu0 %v106
  %v108 = vpop.xlane.xlu0 %107
  %v109 = vsel %vm63, %v62, -inf
  %110 = vmax.xlane.f32.xlu0 %v109
  %v111 = vpop.xlane.xlu0 %110
  %v112 = vld [vmem:[#allocation2] sm:$0xff]
  %v113 = vld [vmem:[#allocation2 + $0x8] sm:$0xff]
  %v114 = vld [vmem:[#allocation2 + $0x10] sm:$0xff]
  %v115 = vld [vmem:[#allocation2 + $0x18] sm:$0xff]
  %v116 = vld [vmem:[#allocation2 + $0x20] sm:$0xff]
  %v117 = vld [vmem:[#allocation2 + $0x28] sm:$0xff]
  %v118 = vld [vmem:[#allocation2 + $0x30] sm:$0xff]
  %v119 = vld [vmem:[#allocation2 + $0x38] sm:$0xff]
  %v120 = vld [vmem:[#allocation2 + $0x40] sm:$0xff]
  %v121 = vld [vmem:[#allocation2 + $0x48] sm:$0xff]
  %v122 = vld [vmem:[#allocation2 + $0x50] sm:$0xff]
  %v123 = vld [vmem:[#allocation2 + $0x58] sm:$0xff]
  %v124 = vld [vmem:[#allocation2 + $0x60] sm:$0xff]
  %v125 = vld [vmem:[#allocation2 + $0x68] sm:$0xff]
  %v126 = vld [vmem:[#allocation2 + $0x70] sm:$0xff]
  %v127 = vld [vmem:[#allocation2 + $0x78] sm:$0xff]
  %vm128 = vcmp.gt.f32.partialorder %v66, %v112
  %vm129 = vcmp.gt.f32.partialorder %v69, %v113
  %vm130 = vcmp.gt.f32.partialorder %v72, %v114
  %vm131 = vcmp.gt.f32.partialorder %v75, %v115
  %vm132 = vcmp.gt.f32.partialorder %v78, %v116
  %vm133 = vcmp.gt.f32.partialorder %v81, %v117
  %vm134 = vcmp.gt.f32.partialorder %v84, %v118
  %vm135 = vcmp.gt.f32.partialorder %v87, %v119
  %vm136 = vcmp.gt.f32.partialorder %v90, %v120
  %vm137 = vcmp.gt.f32.partialorder %v93, %v121
  %vm138 = vcmp.gt.f32.partialorder %v96, %v122
  %vm139 = vcmp.gt.f32.partialorder %v99, %v123
  %vm140 = vcmp.gt.f32.partialorder %v102, %v124
  %vm141 = vcmp.gt.f32.partialorder %v105, %v125
  %vm142 = vcmp.gt.f32.partialorder %v108, %v126
  %vm143 = vcmp.gt.f32.partialorder %v111, %v127
  %vm144 = vcmp.ne.f32.partialorder %v66, %v66
  %vm145 = vcmp.ne.f32.partialorder %v69, %v69
  %vm146 = vcmp.ne.f32.partialorder %v72, %v72
  %vm147 = vcmp.ne.f32.partialorder %v75, %v75
  %vm148 = vcmp.ne.f32.partialorder %v78, %v78
  %vm149 = vcmp.ne.f32.partialorder %v81, %v81
  %vm150 = vcmp.ne.f32.partialorder %v84, %v84
  %vm151 = vcmp.ne.f32.partialorder %v87, %v87
  %vm152 = vcmp.ne.f32.partialorder %v90, %v90
  %vm153 = vcmp.ne.f32.partialorder %v93, %v93
  %vm154 = vcmp.ne.f32.partialorder %v96, %v96
  %vm155 = vcmp.ne.f32.partialorder %v99, %v99
  %vm156 = vcmp.ne.f32.partialorder %v102, %v102
  %vm157 = vcmp.ne.f32.partialorder %v105, %v105
  %vm158 = vcmp.ne.f32.partialorder %v108, %v108
  %vm159 = vcmp.ne.f32.partialorder %v111, %v111
  %vm160 = vcmp.ne.f32.partialorder %v112, %v112
  %vm161 = vcmp.ne.f32.partialorder %v113, %v113
  %vm162 = vcmp.ne.f32.partialorder %v114, %v114
  %vm163 = vcmp.ne.f32.partialorder %v115, %v115
  %vm164 = vcmp.ne.f32.partialorder %v116, %v116
  %vm165 = vcmp.ne.f32.partialorder %v117, %v117
  %vm166 = vcmp.ne.f32.partialorder %v118, %v118
  %vm167 = vcmp.ne.f32.partialorder %v119, %v119
  %vm168 = vcmp.ne.f32.partialorder %v120, %v120
  %vm169 = vcmp.ne.f32.partialorder %v121, %v121
  %vm170 = vcmp.ne.f32.partialorder %v122, %v122
  %vm171 = vcmp.ne.f32.partialorder %v123, %v123
  %vm172 = vcmp.ne.f32.partialorder %v124, %v124
  %vm173 = vcmp.ne.f32.partialorder %v125, %v125
  %vm174 = vcmp.ne.f32.partialorder %v126, %v126
  %vm175 = vcmp.ne.f32.partialorder %v127, %v127
  %vm176 = vmxor %vm160, 1
  %vm177 = vmxor %vm161, 1
  %vm178 = vmxor %vm162, 1
  %vm179 = vmxor %vm163, 1
  %vm180 = vmxor %vm164, 1
  %vm181 = vmxor %vm165, 1
  %vm182 = vmxor %vm166, 1
  %vm183 = vmxor %vm167, 1
  %vm184 = vmxor %vm168, 1
  %vm185 = vmxor %vm169, 1
  %vm186 = vmxor %vm170, 1
  %vm187 = vmxor %vm171, 1
  %vm188 = vmxor %vm172, 1
  %vm189 = vmxor %vm173, 1
  %vm190 = vmxor %vm174, 1
  %vm191 = vmxor %vm175, 1
  %vm192 = vmand %vm144, %vm176
  %vm193 = vmand %vm145, %vm177
  %vm194 = vmand %vm146, %vm178
  %vm195 = vmand %vm147, %vm179
  %vm196 = vmand %vm148, %vm180
  %vm197 = vmand %vm149, %vm181
  %vm198 = vmand %vm150, %vm182
  %vm199 = vmand %vm151, %vm183
  %vm200 = vmand %vm152, %vm184
  %vm201 = vmand %vm153, %vm185
  %vm202 = vmand %vm154, %vm186
  %vm203 = vmand %vm155, %vm187
  %vm204 = vmand %vm156, %vm188
  %vm205 = vmand %vm157, %vm189
  %vm206 = vmand %vm158, %vm190
  %vm207 = vmand %vm159, %vm191
  %vm208 = vmor %vm128, %vm192
  %vm209 = vmor %vm129, %vm193
  %vm210 = vmor %vm130, %vm194
  %vm211 = vmor %vm131, %vm195
  %vm212 = vmor %vm132, %vm196
  %vm213 = vmor %vm133, %vm197
  %vm214 = vmor %vm134, %vm198
  %vm215 = vmor %vm135, %vm199
  %vm216 = vmor %vm136, %vm200
  %vm217 = vmor %vm137, %vm201
  %vm218 = vmor %vm138, %vm202
  %vm219 = vmor %vm139, %vm203
  %vm220 = vmor %vm140, %vm204
  %vm221 = vmor %vm141, %vm205
  %vm222 = vmor %vm142, %vm206
  %vm223 = vmor %vm143, %vm207
  %v224 = vld [vmem:[#allocation3] sm:$0xff]
  %v225 = vld [vmem:[#allocation3 + $0x8] sm:$0xff]
  %v226 = vld [vmem:[#allocation3 + $0x10] sm:$0xff]
  %v227 = vld [vmem:[#allocation3 + $0x18] sm:$0xff]
  %v228 = vld [vmem:[#allocation3 + $0x20] sm:$0xff]
  %v229 = vld [vmem:[#allocation3 + $0x28] sm:$0xff]
  %v230 = vld [vmem:[#allocation3 + $0x30] sm:$0xff]
  %v231 = vld [vmem:[#allocation3 + $0x38] sm:$0xff]
  %v232 = vld [vmem:[#allocation3 + $0x40] sm:$0xff]
  %v233 = vld [vmem:[#allocation3 + $0x48] sm:$0xff]
  %v234 = vld [vmem:[#allocation3 + $0x50] sm:$0xff]
  %v235 = vld [vmem:[#allocation3 + $0x58] sm:$0xff]
  %v236 = vld [vmem:[#allocation3 + $0x60] sm:$0xff]
  %v237 = vld [vmem:[#allocation3 + $0x68] sm:$0xff]
  %v238 = vld [vmem:[#allocation3 + $0x70] sm:$0xff]
  %v239 = vld [vmem:[#allocation3 + $0x78] sm:$0xff]
  %v240 = vlaneseq
  %v241 = vand.u32 %v240, 127
  %s242 = smul.u32 0, 16
  %v243 = vstv %s242
  %v244 = vadd.s32 %v241, %v243
  %vm245 = vcmp.eq.f32.partialorder %v47, %v66
  %vm246 = vcmp.eq.f32.partialorder %v48, %v69
  %vm247 = vcmp.eq.f32.partialorder %v49, %v72
  %vm248 = vcmp.eq.f32.partialorder %v50, %v75
  %vm249 = vcmp.eq.f32.partialorder %v51, %v78
  %vm250 = vcmp.eq.f32.partialorder %v52, %v81
  %vm251 = vcmp.eq.f32.partialorder %v53, %v84
  %vm252 = vcmp.eq.f32.partialorder %v54, %v87
  %vm253 = vcmp.eq.f32.partialorder %v55, %v90
  %vm254 = vcmp.eq.f32.partialorder %v56, %v93
  %vm255 = vcmp.eq.f32.partialorder %v57, %v96
  %vm256 = vcmp.eq.f32.partialorder %v58, %v99
  %vm257 = vcmp.eq.f32.partialorder %v59, %v102
  %vm258 = vcmp.eq.f32.partialorder %v60, %v105
  %vm259 = vcmp.eq.f32.partialorder %v61, %v108
  %vm260 = vcmp.eq.f32.partialorder %v62, %v111
  %vm261 = vcmp.ne.f32.partialorder %v47, %v47
  %vm262 = vcmp.ne.f32.partialorder %v48, %v48
  %vm263 = vcmp.ne.f32.partialorder %v49, %v49
  %vm264 = vcmp.ne.f32.partialorder %v50, %v50
  %vm265 = vcmp.ne.f32.partialorder %v51, %v51
  %vm266 = vcmp.ne.f32.partialorder %v52, %v52
  %vm267 = vcmp.ne.f32.partialorder %v53, %v53
  %vm268 = vcmp.ne.f32.partialorder %v54, %v54
  %vm269 = vcmp.ne.f32.partialorder %v55, %v55
  %vm270 = vcmp.ne.f32.partialorder %v56, %v56
  %vm271 = vcmp.ne.f32.partialorder %v57, %v57
  %vm272 = vcmp.ne.f32.partialorder %v58, %v58
  %vm273 = vcmp.ne.f32.partialorder %v59, %v59
  %vm274 = vcmp.ne.f32.partialorder %v60, %v60
  %vm275 = vcmp.ne.f32.partialorder %v61, %v61
  %vm276 = vcmp.ne.f32.partialorder %v62, %v62
  %vm277 = vmor %vm245, %vm261
  %vm278 = vmor %vm246, %vm262
  %vm279 = vmor %vm247, %vm263
  %vm280 = vmor %vm248, %vm264
  %vm281 = vmor %vm249, %vm265
  %vm282 = vmor %vm250, %vm266
  %vm283 = vmor %vm251, %vm267
  %vm284 = vmor %vm252, %vm268
  %vm285 = vmor %vm253, %vm269
  %vm286 = vmor %vm254, %vm270
  %vm287 = vmor %vm255, %vm271
  %vm288 = vmor %vm256, %vm272
  %vm289 = vmor %vm257, %vm273
  %vm290 = vmor %vm258, %vm274
  %vm291 = vmor %vm259, %vm275
  %vm292 = vmor %vm260, %vm276
  %v293 = vsel %vm277, %v244, 2147483647
  %v294 = vsel %vm278, %v244, 2147483647
  %v295 = vsel %vm279, %v244, 2147483647
  %v296 = vsel %vm280, %v244, 2147483647
  %v297 = vsel %vm281, %v244, 2147483647
  %v298 = vsel %vm282, %v244, 2147483647
  %v299 = vsel %vm283, %v244, 2147483647
  %v300 = vsel %vm284, %v244, 2147483647
  %v301 = vsel %vm285, %v244, 2147483647
  %v302 = vsel %vm286, %v244, 2147483647
  %v303 = vsel %vm287, %v244, 2147483647
  %v304 = vsel %vm288, %v244, 2147483647
  %v305 = vsel %vm289, %v244, 2147483647
  %v306 = vsel %vm290, %v244, 2147483647
  %v307 = vsel %vm291, %v244, 2147483647
  %v308 = vsel %vm292, %v244, 2147483647
  %v309 = vsel %vm63, %v293, 2147483647
  %v310 = vand.u32 %v309, 65535
  %v311 = vshra.s32 %v309, 16
  %v312 = vcvt.s32.f32 %v310
  %v313 = vcvt.s32.f32 %v311
  %314 = vmin.xlane.f32.xlu0 %v313
  %v315 = vpop.xlane.xlu0 %314
  %vm316 = vcmp.eq.f32.partialorder %v313, %v315
  %v317 = vsel %vm316, %v312, inf
  %318 = vmin.xlane.f32.xlu0 %v317
  %v319 = vpop.xlane.xlu0 %318
  %v320 = vcvt.f32.s32 %v319
  %v321 = vcvt.f32.s32 %v315
  %v322 = vshll.u32 %v321, 16
  %v323 = vadd.s32 %v322, %v320
  %v324 = vsel %vm63, %v294, 2147483647
  %v325 = vand.u32 %v324, 65535
  %v326 = vshra.s32 %v324, 16
  %v327 = vcvt.s32.f32 %v325
  %v328 = vcvt.s32.f32 %v326
  %329 = vmin.xlane.f32.xlu0 %v328
  %v330 = vpop.xlane.xlu0 %329
  %vm331 = vcmp.eq.f32.partialorder %v328, %v330
  %v332 = vsel %vm331, %v327, inf
  %333 = vmin.xlane.f32.xlu0 %v332
  %v334 = vpop.xlane.xlu0 %333
  %v335 = vcvt.f32.s32 %v334
  %v336 = vcvt.f32.s32 %v330
  %v337 = vshll.u32 %v336, 16
  %v338 = vadd.s32 %v337, %v335
  %v339 = vsel %vm63, %v295, 2147483647
  %v340 = vand.u32 %v339, 65535
  %v341 = vshra.s32 %v339, 16
  %v342 = vcvt.s32.f32 %v340
  %v343 = vcvt.s32.f32 %v341
  %344 = vmin.xlane.f32.xlu0 %v343
  %v345 = vpop.xlane.xlu0 %344
  %vm346 = vcmp.eq.f32.partialorder %v343, %v345
  %v347 = vsel %vm346, %v342, inf
  %348 = vmin.xlane.f32.xlu0 %v347
  %v349 = vpop.xlane.xlu0 %348
  %v350 = vcvt.f32.s32 %v349
  %v351 = vcvt.f32.s32 %v345
  %v352 = vshll.u32 %v351, 16
  %v353 = vadd.s32 %v352, %v350
  %v354 = vsel %vm63, %v296, 2147483647
  %v355 = vand.u32 %v354, 65535
  %v356 = vshra.s32 %v354, 16
  %v357 = vcvt.s32.f32 %v355
  %v358 = vcvt.s32.f32 %v356
  %359 = vmin.xlane.f32.xlu0 %v358
  %v360 = vpop.xlane.xlu0 %359
  %vm361 = vcmp.eq.f32.partialorder %v358, %v360
  %v362 = vsel %vm361, %v357, inf
  %363 = vmin.xlane.f32.xlu0 %v362
  %v364 = vpop.xlane.xlu0 %363
  %v365 = vcvt.f32.s32 %v364
  %v366 = vcvt.f32.s32 %v360
  %v367 = vshll.u32 %v366, 16
  %v368 = vadd.s32 %v367, %v365
  %v369 = vsel %vm63, %v297, 2147483647
  %v370 = vand.u32 %v369, 65535
  %v371 = vshra.s32 %v369, 16
  %v372 = vcvt.s32.f32 %v370
  %v373 = vcvt.s32.f32 %v371
  %374 = vmin.xlane.f32.xlu0 %v373
  %v375 = vpop.xlane.xlu0 %374
  %vm376 = vcmp.eq.f32.partialorder %v373, %v375
  %v377 = vsel %vm376, %v372, inf
  %378 = vmin.xlane.f32.xlu0 %v377
  %v379 = vpop.xlane.xlu0 %378
  %v380 = vcvt.f32.s32 %v379
  %v381 = vcvt.f32.s32 %v375
  %v382 = vshll.u32 %v381, 16
  %v383 = vadd.s32 %v382, %v380
  %v384 = vsel %vm63, %v298, 2147483647
  %v385 = vand.u32 %v384, 65535
  %v386 = vshra.s32 %v384, 16
  %v387 = vcvt.s32.f32 %v385
  %v388 = vcvt.s32.f32 %v386
  %389 = vmin.xlane.f32.xlu0 %v388
  %v390 = vpop.xlane.xlu0 %389
  %vm391 = vcmp.eq.f32.partialorder %v388, %v390
  %v392 = vsel %vm391, %v387, inf
  %393 = vmin.xlane.f32.xlu0 %v392
  %v394 = vpop.xlane.xlu0 %393
  %v395 = vcvt.f32.s32 %v394
  %v396 = vcvt.f32.s32 %v390
  %v397 = vshll.u32 %v396, 16
  %v398 = vadd.s32 %v397, %v395
  %v399 = vsel %vm63, %v299, 2147483647
  %v400 = vand.u32 %v399, 65535
  %v401 = vshra.s32 %v399, 16
  %v402 = vcvt.s32.f32 %v400
  %v403 = vcvt.s32.f32 %v401
  %404 = vmin.xlane.f32.xlu0 %v403
  %v405 = vpop.xlane.xlu0 %404
  %vm406 = vcmp.eq.f32.partialorder %v403, %v405
  %v407 = vsel %vm406, %v402, inf
  %408 = vmin.xlane.f32.xlu0 %v407
  %v409 = vpop.xlane.xlu0 %408
  %v410 = vcvt.f32.s32 %v409
  %v411 = vcvt.f32.s32 %v405
  %v412 = vshll.u32 %v411, 16
  %v413 = vadd.s32 %v412, %v410
  %v414 = vsel %vm63, %v300, 2147483647
  %v415 = vand.u32 %v414, 65535
  %v416 = vshra.s32 %v414, 16
  %v417 = vcvt.s32.f32 %v415
  %v418 = vcvt.s32.f32 %v416
  %419 = vmin.xlane.f32.xlu0 %v418
  %v420 = vpop.xlane.xlu0 %419
  %vm421 = vcmp.eq.f32.partialorder %v418, %v420
  %v422 = vsel %vm421, %v417, inf
  %423 = vmin.xlane.f32.xlu0 %v422
  %v424 = vpop.xlane.xlu0 %423
  %v425 = vcvt.f32.s32 %v424
  %v426 = vcvt.f32.s32 %v420
  %v427 = vshll.u32 %v426, 16
  %v428 = vadd.s32 %v427, %v425
  %v429 = vsel %vm63, %v301, 2147483647
  %v430 = vand.u32 %v429, 65535
  %v431 = vshra.s32 %v429, 16
  %v432 = vcvt.s32.f32 %v430
  %v433 = vcvt.s32.f32 %v431
  %434 = vmin.xlane.f32.xlu0 %v433
  %v435 = vpop.xlane.xlu0 %434
  %vm436 = vcmp.eq.f32.partialorder %v433, %v435
  %v437 = vsel %vm436, %v432, inf
  %438 = vmin.xlane.f32.xlu0 %v437
  %v439 = vpop.xlane.xlu0 %438
  %v440 = vcvt.f32.s32 %v439
  %v441 = vcvt.f32.s32 %v435
  %v442 = vshll.u32 %v441, 16
  %v443 = vadd.s32 %v442, %v440
  %v444 = vsel %vm63, %v302, 2147483647
  %v445 = vand.u32 %v444, 65535
  %v446 = vshra.s32 %v444, 16
  %v447 = vcvt.s32.f32 %v445
  %v448 = vcvt.s32.f32 %v446
  %449 = vmin.xlane.f32.xlu0 %v448
  %v450 = vpop.xlane.xlu0 %449
  %vm451 = vcmp.eq.f32.partialorder %v448, %v450
  %v452 = vsel %vm451, %v447, inf
  %453 = vmin.xlane.f32.xlu0 %v452
  %v454 = vpop.xlane.xlu0 %453
  %v455 = vcvt.f32.s32 %v454
  %v456 = vcvt.f32.s32 %v450
  %v457 = vshll.u32 %v456, 16
  %v458 = vadd.s32 %v457, %v455
  %v459 = vsel %vm63, %v303, 2147483647
  %v460 = vand.u32 %v459, 65535
  %v461 = vshra.s32 %v459, 16
  %v462 = vcvt.s32.f32 %v460
  %v463 = vcvt.s32.f32 %v461
  %464 = vmin.xlane.f32.xlu0 %v463
  %v465 = vpop.xlane.xlu0 %464
  %vm466 = vcmp.eq.f32.partialorder %v463, %v465
  %v467 = vsel %vm466, %v462, inf
  %468 = vmin.xlane.f32.xlu0 %v467
  %v469 = vpop.xlane.xlu0 %468
  %v470 = vcvt.f32.s32 %v469
  %v471 = vcvt.f32.s32 %v465
  %v472 = vshll.u32 %v471, 16
  %v473 = vadd.s32 %v472, %v470
  %v474 = vsel %vm63, %v304, 2147483647
  %v475 = vand.u32 %v474, 65535
  %v476 = vshra.s32 %v474, 16
  %v477 = vcvt.s32.f32 %v475
  %v478 = vcvt.s32.f32 %v476
  %479 = vmin.xlane.f32.xlu0 %v478
  %v480 = vpop.xlane.xlu0 %479
  %vm481 = vcmp.eq.f32.partialorder %v478, %v480
  %v482 = vsel %vm481, %v477, inf
  %483 = vmin.xlane.f32.xlu0 %v482
  %v484 = vpop.xlane.xlu0 %483
  %v485 = vcvt.f32.s32 %v484
  %v486 = vcvt.f32.s32 %v480
  %v487 = vshll.u32 %v486, 16
  %v488 = vadd.s32 %v487, %v485
  %v489 = vsel %vm63, %v305, 2147483647
  %v490 = vand.u32 %v489, 65535
  %v491 = vshra.s32 %v489, 16
  %v492 = vcvt.s32.f32 %v490
  %v493 = vcvt.s32.f32 %v491
  %494 = vmin.xlane.f32.xlu0 %v493
  %v495 = vpop.xlane.xlu0 %494
  %vm496 = vcmp.eq.f32.partialorder %v493, %v495
  %v497 = vsel %vm496, %v492, inf
  %498 = vmin.xlane.f32.xlu0 %v497
  %v499 = vpop.xlane.xlu0 %498
  %v500 = vcvt.f32.s32 %v499
  %v501 = vcvt.f32.s32 %v495
  %v502 = vshll.u32 %v501, 16
  %v503 = vadd.s32 %v502, %v500
  %v504 = vsel %vm63, %v306, 2147483647
  %v505 = vand.u32 %v504, 65535
  %v506 = vshra.s32 %v504, 16
  %v507 = vcvt.s32.f32 %v505
  %v508 = vcvt.s32.f32 %v506
  %509 = vmin.xlane.f32.xlu0 %v508
  %v510 = vpop.xlane.xlu0 %509
  %vm511 = vcmp.eq.f32.partialorder %v508, %v510
  %v512 = vsel %vm511, %v507, inf
  %513 = vmin.xlane.f32.xlu0 %v512
  %v514 = vpop.xlane.xlu0 %513
  %v515 = vcvt.f32.s32 %v514
  %v516 = vcvt.f32.s32 %v510
  %v517 = vshll.u32 %v516, 16
  %v518 = vadd.s32 %v517, %v515
  %v519 = vsel %vm63, %v307, 2147483647
  %v520 = vand.u32 %v519, 65535
  %v521 = vshra.s32 %v519, 16
  %v522 = vcvt.s32.f32 %v520
  %v523 = vcvt.s32.f32 %v521
  %524 = vmin.xlane.f32.xlu0 %v523
  %v525 = vpop.xlane.xlu0 %524
  %vm526 = vcmp.eq.f32.partialorder %v523, %v525
  %v527 = vsel %vm526, %v522, inf
  %528 = vmin.xlane.f32.xlu0 %v527
  %v529 = vpop.xlane.xlu0 %528
  %v530 = vcvt.f32.s32 %v529
  %v531 = vcvt.f32.s32 %v525
  %v532 = vshll.u32 %v531, 16
  %v533 = vadd.s32 %v532, %v530
  %v534 = vsel %vm63, %v308, 2147483647
  %v535 = vand.u32 %v534, 65535
  %v536 = vshra.s32 %v534, 16
  %v537 = vcvt.s32.f32 %v535
  %v538 = vcvt.s32.f32 %v536
  %539 = vmin.xlane.f32.xlu0 %v538
  %v540 = vpop.xlane.xlu0 %539
  %vm541 = vcmp.eq.f32.partialorder %v538, %v540
  %v542 = vsel %vm541, %v537, inf
  %543 = vmin.xlane.f32.xlu0 %v542
  %v544 = vpop.xlane.xlu0 %543
  %v545 = vcvt.f32.s32 %v544
  %v546 = vcvt.f32.s32 %v540
  %v547 = vshll.u32 %v546, 16
  %v548 = vadd.s32 %v547, %v545
  %v549 = vsel %vm208, %v323, %v224
  %v550 = vsel %vm209, %v338, %v225
  %v551 = vsel %vm210, %v353, %v226
  %v552 = vsel %vm211, %v368, %v227
  %v553 = vsel %vm212, %v383, %v228
  %v554 = vsel %vm213, %v398, %v229
  %v555 = vsel %vm214, %v413, %v230
  %v556 = vsel %vm215, %v428, %v231
  %v557 = vsel %vm216, %v443, %v232
  %v558 = vsel %vm217, %v458, %v233
  %v559 = vsel %vm218, %v473, %v234
  %v560 = vsel %vm219, %v488, %v235
  %v561 = vsel %vm220, %v503, %v236
  %v562 = vsel %vm221, %v518, %v237
  %v563 = vsel %vm222, %v533, %v238
  %v564 = vsel %vm223, %v548, %v239
  %vm565 = vcmask 7168
  %566 = vst.msk [vmem:[#allocation3] sm:$0xff] %vm565, %v549
  %567 = vst.msk [vmem:[#allocation3 + $0x8] sm:$0xff] %vm565, %v550
  %568 = vst.msk [vmem:[#allocation3 + $0x10] sm:$0xff] %vm565, %v551
  %569 = vst.msk [vmem:[#allocation3 + $0x18] sm:$0xff] %vm565, %v552
  %570 = vst.msk [vmem:[#allocation3 + $0x20] sm:$0xff] %vm565, %v553
  %571 = vst.msk [vmem:[#allocation3 + $0x28] sm:$0xff] %vm565, %v554
  %572 = vst.msk [vmem:[#allocation3 + $0x30] sm:$0xff] %vm565, %v555
  %573 = vst.msk [vmem:[#allocation3 + $0x38] sm:$0xff] %vm565, %v556
  %574 = vst.msk [vmem:[#allocation3 + $0x40] sm:$0xff] %vm565, %v557
  %575 = vst.msk [vmem:[#allocation3 + $0x48] sm:$0xff] %vm565, %v558
  %576 = vst.msk [vmem:[#allocation3 + $0x50] sm:$0xff] %vm565, %v559
  %577 = vst.msk [vmem:[#allocation3 + $0x58] sm:$0xff] %vm565, %v560
  %578 = vst.msk [vmem:[#allocation3 + $0x60] sm:$0xff] %vm565, %v561
  %579 = vst.msk [vmem:[#allocation3 + $0x68] sm:$0xff] %vm565, %v562
  %580 = vst.msk [vmem:[#allocation3 + $0x70] sm:$0xff] %vm565, %v563
  %581 = vst.msk [vmem:[#allocation3 + $0x78] sm:$0xff] %vm565, %v564
  %v582 = vsel %vm208, %v66, %v112
  %v583 = vsel %vm209, %v69, %v113
  %v584 = vsel %vm210, %v72, %v114
  %v585 = vsel %vm211, %v75, %v115
  %v586 = vsel %vm212, %v78, %v116
  %v587 = vsel %vm213, %v81, %v117
  %v588 = vsel %vm214, %v84, %v118
  %v589 = vsel %vm215, %v87, %v119
  %v590 = vsel %vm216, %v90, %v120
  %v591 = vsel %vm217, %v93, %v121
  %v592 = vsel %vm218, %v96, %v122
  %v593 = vsel %vm219, %v99, %v123
  %v594 = vsel %vm220, %v102, %v124
  %v595 = vsel %vm221, %v105, %v125
  %v596 = vsel %vm222, %v108, %v126
  %v597 = vsel %vm223, %v111, %v127
  %598 = vst.msk [vmem:[#allocation2] sm:$0xff] %vm565, %v582
  %599 = vst.msk [vmem:[#allocation2 + $0x8] sm:$0xff] %vm565, %v583
  %600 = vst.msk [vmem:[#allocation2 + $0x10] sm:$0xff] %vm565, %v584
  %601 = vst.msk [vmem:[#allocation2 + $0x18] sm:$0xff] %vm565, %v585
  %602 = vst.msk [vmem:[#allocation2 + $0x20] sm:$0xff] %vm565, %v586
  %603 = vst.msk [vmem:[#allocation2 + $0x28] sm:$0xff] %vm565, %v587
  %604 = vst.msk [vmem:[#allocation2 + $0x30] sm:$0xff] %vm565, %v588
  %605 = vst.msk [vmem:[#allocation2 + $0x38] sm:$0xff] %vm565, %v589
  %606 = vst.msk [vmem:[#allocation2 + $0x40] sm:$0xff] %vm565, %v590
  %607 = vst.msk [vmem:[#allocation2 + $0x48] sm:$0xff] %vm565, %v591
  %608 = vst.msk [vmem:[#allocation2 + $0x50] sm:$0xff] %vm565, %v592
  %609 = vst.msk [vmem:[#allocation2 + $0x58] sm:$0xff] %vm565, %v593
  %610 = vst.msk [vmem:[#allocation2 + $0x60] sm:$0xff] %vm565, %v594
  %611 = vst.msk [vmem:[#allocation2 + $0x68] sm:$0xff] %vm565, %v595
  %612 = vst.msk [vmem:[#allocation2 + $0x70] sm:$0xff] %vm565, %v596
  %613 = vst.msk [vmem:[#allocation2 + $0x78] sm:$0xff] %vm565, %v597
  // Predicated region
  $region10: #{tpu_custom_call.1} parent=0 // pred_check
    %p614 = pneg %p10
  $region11: #{tpu_custom_call.1} parent=0 // pred_check_branch
    %616 = sbr.rel (%p614) target = $region13
  $region12: #{tpu_custom_call.1} parent=0 // pred_region
    %v617 = vld [vmem:[#allocation2] sm:$0xff]
    %v618 = vld [vmem:[#allocation2 + $0x8] sm:$0xff]
    %v619 = vld [vmem:[#allocation2 + $0x10] sm:$0xff]
    %v620 = vld [vmem:[#allocation2 + $0x18] sm:$0xff]
    %v621 = vld [vmem:[#allocation2 + $0x20] sm:$0xff]
    %v622 = vld [vmem:[#allocation2 + $0x28] sm:$0xff]
    %v623 = vld [vmem:[#allocation2 + $0x30] sm:$0xff]
    %v624 = vld [vmem:[#allocation2 + $0x38] sm:$0xff]
    %v625 = vld [vmem:[#allocation2 + $0x40] sm:$0xff]
    %v626 = vld [vmem:[#allocation2 + $0x48] sm:$0xff]
    %v627 = vld [vmem:[#allocation2 + $0x50] sm:$0xff]
    %v628 = vld [vmem:[#allocation2 + $0x58] sm:$0xff]
    %v629 = vld [vmem:[#allocation2 + $0x60] sm:$0xff]
    %v630 = vld [vmem:[#allocation2 + $0x68] sm:$0xff]
    %v631 = vld [vmem:[#allocation2 + $0x70] sm:$0xff]
    %v632 = vld [vmem:[#allocation2 + $0x78] sm:$0xff]
    %633 = vst.msk [vmem:[%s1] sm:$0xff] %vm565, %v617
    %634 = vst.msk [vmem:[%s1 + $0x8] sm:$0xff] %vm565, %v618
    %635 = vst.msk [vmem:[%s1 + $0x10] sm:$0xff] %vm565, %v619
    %636 = vst.msk [vmem:[%s1 + $0x18] sm:$0xff] %vm565, %v620
    %637 = vst.msk [vmem:[%s1 + $0x20] sm:$0xff] %vm565, %v621
    %638 = vst.msk [vmem:[%s1 + $0x28] sm:$0xff] %vm565, %v622
    %639 = vst.msk [vmem:[%s1 + $0x30] sm:$0xff] %vm565, %v623
    %640 = vst.msk [vmem:[%s1 + $0x38] sm:$0xff] %vm565, %v624
    %641 = vst.msk [vmem:[%s1 + $0x40] sm:$0xff] %vm565, %v625
    %642 = vst.msk [vmem:[%s1 + $0x48] sm:$0xff] %vm565, %v626
    %643 = vst.msk [vmem:[%s1 + $0x50] sm:$0xff] %vm565, %v627
    %644 = vst.msk [vmem:[%s1 + $0x58] sm:$0xff] %vm565, %v628
    %645 = vst.msk [vmem:[%s1 + $0x60] sm:$0xff] %vm565, %v629
    %646 = vst.msk [vmem:[%s1 + $0x68] sm:$0xff] %vm565, %v630
    %647 = vst.msk [vmem:[%s1 + $0x70] sm:$0xff] %vm565, %v631
    %648 = vst.msk [vmem:[%s1 + $0x78] sm:$0xff] %vm565, %v632
    %v649 = vld [vmem:[#allocation3] sm:$0xff]
    %v650 = vld [vmem:[#allocation3 + $0x8] sm:$0xff]
    %v651 = vld [vmem:[#allocation3 + $0x10] sm:$0xff]
    %v652 = vld [vmem:[#allocation3 + $0x18] sm:$0xff]
    %v653 = vld [vmem:[#allocation3 + $0x20] sm:$0xff]
    %v654 = vld [vmem:[#allocation3 + $0x28] sm:$0xff]
    %v655 = vld [vmem:[#allocation3 + $0x30] sm:$0xff]
    %v656 = vld [vmem:[#allocation3 + $0x38] sm:$0xff]
    %v657 = vld [vmem:[#allocation3 + $0x40] sm:$0xff]
    %v658 = vld [vmem:[#allocation3 + $0x48] sm:$0xff]
    %v659 = vld [vmem:[#allocation3 + $0x50] sm:$0xff]
    %v660 = vld [vmem:[#allocation3 + $0x58] sm:$0xff]
    %v661 = vld [vmem:[#allocation3 + $0x60] sm:$0xff]
    %v662 = vld [vmem:[#allocation3 + $0x68] sm:$0xff]
    %v663 = vld [vmem:[#allocation3 + $0x70] sm:$0xff]
    %v664 = vld [vmem:[#allocation3 + $0x78] sm:$0xff]
    %665 = vst.msk [vmem:[%s2] sm:$0xff] %vm565, %v649
    %666 = vst.msk [vmem:[%s2 + $0x8] sm:$0xff] %vm565, %v650
    %667 = vst.msk [vmem:[%s2 + $0x10] sm:$0xff] %vm565, %v651
    %668 = vst.msk [vmem:[%s2 + $0x18] sm:$0xff] %vm565, %v652
    %669 = vst.msk [vmem:[%s2 + $0x20] sm:$0xff] %vm565, %v653
    %670 = vst.msk [vmem:[%s2 + $0x28] sm:$0xff] %vm565, %v654
    %671 = vst.msk [vmem:[%s2 + $0x30] sm:$0xff] %vm565, %v655
    %672 = vst.msk [vmem:[%s2 + $0x38] sm:$0xff] %vm565, %v656
    %673 = vst.msk [vmem:[%s2 + $0x40] sm:$0xff] %vm565, %v657
    %674 = vst.msk [vmem:[%s2 + $0x48] sm:$0xff] %vm565, %v658
    %675 = vst.msk [vmem:[%s2 + $0x50] sm:$0xff] %vm565, %v659
    %676 = vst.msk [vmem:[%s2 + $0x58] sm:$0xff] %vm565, %v660
    %677 = vst.msk [vmem:[%s2 + $0x60] sm:$0xff] %vm565, %v661
    %678 = vst.msk [vmem:[%s2 + $0x68] sm:$0xff] %vm565, %v662
    %679 = vst.msk [vmem:[%s2 + $0x70] sm:$0xff] %vm565, %v663
    %680 = vst.msk [vmem:[%s2 + $0x78] sm:$0xff] %vm565, %v664
  $region13: #{tpu_custom_call.1} parent=0 // pred_fallthru
    _
  // Predicated region
  $region14: #{tpu_custom_call.1} parent=0 // pred_check
    _
  $region15: #{tpu_custom_call.1} parent=0 // pred_check_branch
    %682 = sbr.rel (0) target = $region17
  $region16: #{tpu_custom_call.1} parent=0 // pred_region
    _
  $region17: #{tpu_custom_call.1} parent=0 // pred_fallthru
    _
  // Predicated region
  $region18: #{tpu_custom_call.1} parent=0 // pred_check
    _
  $region19: #{tpu_custom_call.1} parent=0 // pred_check_branch
    %684 = sbr.rel (0) target = $region21
  $region20: #{tpu_custom_call.1} parent=0 // pred_region
    _
  $region21: #{tpu_custom_call.1} parent=0 // pred_fallthru
    _
  // Predicated region
  $region22: #{tpu_custom_call.1} parent=0 // pred_check
    _
  $region23: #{tpu_custom_call.1} parent=0 // pred_check_branch
    %686 = sbr.rel (0) target = $region25
  $region24: #{tpu_custom_call.1} parent=0 // pred_region
    _
  $region25: #{tpu_custom_call.1} parent=0 // pred_fallthru
    _
  // Predicated region
  $region26: #{tpu_custom_call.1} parent=0 // pred_check
    _
  $region27: #{tpu_custom_call.1} parent=0 // pred_check_branch
    %688 = sbr.rel (0) target = $region29
  $region28: #{tpu_custom_call.1} parent=0 // pred_region
    _
  $region29: #{tpu_custom_call.1} parent=0 // pred_fallthru
    _

</llo_original>
